<compile_context>
chip_gen: v6e
topology: v6e:2x2x1
jax: 0.10.0
libtpu: 0.0.40
codegen_flags: <defaults>
</compile_context>

<pallas_src>
import functools

import jax
import jax.numpy as jnp
from jax import lax
from jax.experimental import pallas as pl
from jax.experimental.pallas import tpu as pltpu

EPS = 1e-5


# ----------------------------------------------------------------------------
# Pallas kernel: one M-tile of relu((Cout,K)@(K,tm) + b) + per-channel partial
# sum / sum-of-squares for training-mode BatchNorm.
# ----------------------------------------------------------------------------
def _conv_relu_stats_kernel(w_ref, b_ref, p_ref, y_ref, sum_ref, sq_ref, *,
                            m_valid, tm):
    i = pl.program_id(0)

    acc = jnp.dot(w_ref[...], p_ref[...], preferred_element_type=jnp.float32)
    y = jnp.maximum(acc + b_ref[...], 0.0)               # (Cout, tm), f32
    y_ref[...] = y.astype(y_ref.dtype)                   # lane-dense store

    # Mask columns that are pure padding (M rounded up to a multiple of tm)
    # so they do not pollute the BatchNorm statistics.
    col = i * tm + lax.broadcasted_iota(jnp.int32, (1, tm), 1)
    ym = jnp.where(col < m_valid, y, 0.0)

    sum_ref[...] = jnp.sum(ym, axis=1, keepdims=True).reshape(1, -1, 1)
    sq_ref[...] = jnp.sum(ym * ym, axis=1, keepdims=True).reshape(1, -1, 1)


def conv3x3_relu_stats(patches_t, w_t, b, m_valid, tm=512):
    """patches_t: (K, Mpad) bf16, w_t: (Cout, K) bf16, b: (Cout,) f32.

    Returns y_t (Cout, Mpad) f32 and per-tile partial stats (grid, Cout, 1)."""
    K, m_pad = patches_t.shape
    cout = w_t.shape[0]
    assert m_pad % tm == 0
    grid_m = m_pad // tm

    kernel = functools.partial(_conv_relu_stats_kernel, m_valid=m_valid, tm=tm)
    y_t, psum, psq = pl.pallas_call(
        kernel,
        out_shape=(
            jax.ShapeDtypeStruct((cout, m_pad), jnp.float32),
            jax.ShapeDtypeStruct((grid_m, cout, 1), jnp.float32),
            jax.ShapeDtypeStruct((grid_m, cout, 1), jnp.float32),
        ),
        grid=(grid_m,),
        in_specs=[
            pl.BlockSpec((cout, K), lambda i: (0, 0)),       # weights
            pl.BlockSpec((cout, 1), lambda i: (0, 0)),       # bias
            pl.BlockSpec((K, tm), lambda i: (0, i)),         # patch columns
        ],
        out_specs=(
            pl.BlockSpec((cout, tm), lambda i: (0, i)),      # lane-dense output
            pl.BlockSpec((1, cout, 1), lambda i: (i, 0, 0)),  # partial sums
            pl.BlockSpec((1, cout, 1), lambda i: (i, 0, 0)),  # partial sumsq
        ),
        compiler_params=pltpu.CompilerParams(
            dimension_semantics=("parallel",),   # no resident accumulator
            vmem_limit_bytes=32 * 1024 * 1024,
        ),
    )(w_t, b.reshape(cout, 1).astype(jnp.float32), patches_t)
    return y_t, psum, psq


# ----------------------------------------------------------------------------
# Glue (channels-first im2col, BN math, stage composition) in plain JAX
# ----------------------------------------------------------------------------
def _im2col_t_3x3_same(x_c):
    """(C, N, H, W) -> (9*C, N*H*W) in bf16; K ordering (ky, kx, c)."""
    C, N, H, W = x_c.shape
    xp = jnp.pad(x_c.astype(jnp.bfloat16), ((0, 0), (0, 0), (1, 1), (1, 1)))
    taps = [xp[:, :, dy:dy + H, dx:dx + W] for dy in range(3) for dx in range(3)]
    p = jnp.stack(taps, axis=0)                 # (9, C, N, H, W)
    return p.reshape(9 * C, N * H * W)


def _stage(x_c, w_oihw, bias, gamma, beta, tm):
    """Conv3x3(pad=1) + ReLU + BatchNorm (batch statistics), channels-first."""
    cin, N, H, W = x_c.shape
    cout = w_oihw.shape[0]
    M = N * H * W

    patches_t = _im2col_t_3x3_same(x_c)                          # (9*Cin, M)
    grid_m = (M + tm - 1) // tm
    m_pad = grid_m * tm
    if m_pad != M:
        patches_t = jnp.pad(patches_t, ((0, 0), (0, m_pad - M)))

    # (Cout, Cin, 3, 3) -> (Cout, ky, kx, Cin) -> (Cout, 9*Cin): matches patches.
    w_t = jnp.transpose(w_oihw, (0, 2, 3, 1)).reshape(cout, -1).astype(jnp.bfloat16)

    y_t, psum, psq = conv3x3_relu_stats(patches_t, w_t, bias, M, tm=tm)

    s = jnp.sum(psum[:, :, 0], axis=0)                 # (Cout,)
    sq = jnp.sum(psq[:, :, 0], axis=0)                 # (Cout,)
    mean = s / M
    var = jnp.maximum(sq / M - mean * mean, 0.0)       # biased var, clamped
    scale = gamma / jnp.sqrt(var + EPS)
    shift = beta - mean * scale

    # Per-channel affine stays in plain JAX: XLA fuses it into the next
    # stage's pad/im2col (or the final transpose) -> no extra HBM pass.
    y = y_t[:, :M] * scale[:, None] + shift[:, None]
    return y.reshape(cout, N, H, W)


def unet_conv_block(x_nchw, params, tm=512):
    x_c = jnp.transpose(x_nchw, (1, 0, 2, 3))          # (N,C,H,W) -> (C,N,H,W)
    h = _stage(x_c, params["w1"], params["b1"], params["g1"], params["be1"], tm)
    h = _stage(h, params["w2"], params["b2"], params["g2"], params["be2"], tm)
    return jnp.transpose(h, (1, 0, 2, 3))              # back to NCHW


# ----------------------------------------------------------------------------
# Pure-JAX reference (for correctness check)
# ----------------------------------------------------------------------------
def unet_conv_block_ref(x, params):
    def conv(x, w, b):
        y = jax.lax.conv_general_dilated(
            x, w, window_strides=(1, 1), padding=((1, 1), (1, 1)),
            dimension_numbers=("NCHW", "OIHW", "NCHW"))
        return y + b[None, :, None, None]

    def bn(y, g, be):
        mean = jnp.mean(y, axis=(0, 2, 3), keepdims=True)
        var = jnp.mean((y - mean) ** 2, axis=(0, 2, 3), keepdims=True)
        return (y - mean) / jnp.sqrt(var + EPS) * g[None, :, None, None] \
            + be[None, :, None, None]

    y = jnp.maximum(conv(x, params["w1"], params["b1"]), 0.0)
    y = bn(y, params["g1"], params["be1"])
    y = jnp.maximum(conv(y, params["w2"], params["b2"]), 0.0)
    y = bn(y, params["g2"], params["be2"])
    return y


# ----------------------------------------------------------------------------
# main
# ----------------------------------------------------------------------------
if __name__ == "__main__":
    # UNetConvBlock(in_chans=3, out_chans=8, padding=True, batch_norm=True)
    N, Cin, Cout, H, W = 2, 3, 8, 16, 16      # M = N*H*W = 512 -> one grid step

    key = jax.random.PRNGKey(0)
    k1, k2, k3, k4, kx = jax.random.split(key, 5)
    params = {
        "w1": jax.random.normal(k1, (Cout, Cin, 3, 3), jnp.float32) * 0.1,
        "b1": jax.random.normal(k2, (Cout,), jnp.float32) * 0.1,
        "g1": jnp.ones((Cout,), jnp.float32),    # BatchNorm2d default weight
        "be1": jnp.zeros((Cout,), jnp.float32),  # BatchNorm2d default bias
        "w2": jax.random.normal(k3, (Cout, Cout, 3, 3), jnp.float32) * 0.1,
        "b2": jax.random.normal(k4, (Cout,), jnp.float32) * 0.1,
        "g2": jnp.ones((Cout,), jnp.float32),
        "be2": jnp.zeros((Cout,), jnp.float32),
    }
    x = jax.random.normal(kx, (N, Cin, H, W), jnp.float32)

    fwd = jax.jit(functools.partial(unet_conv_block, tm=512))
    out = jax.block_until_ready(fwd(x, params))
    ref = jax.block_until_ready(unet_conv_block_ref(x, params))

    assert out.shape == (N, Cout, H, W), out.shape
    # bf16 MXU inputs -> a few 1e-3..1e-2 abs error after two conv+BN stages.
    assert jnp.allclose(out, ref, rtol=5e-2, atol=5e-2), \
        float(jnp.max(jnp.abs(out - ref)))

    print("KERNEL_OK")
</pallas_src>

<mosaic_0001>
module attributes {stable_mosaic.version = 11 : i64} {
  func.func @_conv_relu_stats_kernel(%arg0: i32, %arg1: memref<8x27xbf16, #tpu.memory_space<vmem>>, %arg2: memref<8x1xf32, #tpu.memory_space<vmem>>, %arg3: memref<27x512xbf16, #tpu.memory_space<vmem>>, %arg4: memref<8x512xf32, #tpu.memory_space<vmem>>, %arg5: memref<1x8x1xf32, #tpu.memory_space<vmem>>, %arg6: memref<1x8x1xf32, #tpu.memory_space<vmem>>) attributes {dimension_semantics = [#tpu.dimension_semantics<parallel>], iteration_bounds = array<i64: 1>, scalar_prefetch = 0 : i64, scratch_operands = 0 : i64, tpu.core_type = #tpu.core_type<tc>, window_params = [{pipeline_mode = #tpu.pipeline_mode<synchronous>, transform_indices = @transform_0, window_bounds = array<i64: 8, 27>}, {pipeline_mode = #tpu.pipeline_mode<synchronous>, transform_indices = @transform_1, window_bounds = array<i64: 8, 1>}, {transform_indices = @transform_2, window_bounds = array<i64: 27, 512>}, {transform_indices = @transform_3, window_bounds = array<i64: 8, 512>}, {transform_indices = @transform_4, window_bounds = array<i64: 1, 8, 1>}, {transform_indices = @transform_5, window_bounds = array<i64: 1, 8, 1>}]} {
    %c0 = arith.constant 0 : index
    %c0_0 = arith.constant 0 : index
    %0 = vector.load %arg1[%c0, %c0_0] : memref<8x27xbf16, #tpu.memory_space<vmem>>, vector<8x27xbf16>
    %c0_1 = arith.constant 0 : index
    %c0_2 = arith.constant 0 : index
    %1 = vector.load %arg3[%c0_1, %c0_2] : memref<27x512xbf16, #tpu.memory_space<vmem>>, vector<27x512xbf16>
    %cst = arith.constant dense<0.000000e+00> : vector<8x512xf32>
    %2 = tpu.matmul %0, %1, %cst {dimension_numbers = #tpu.dot_dimension_numbers<[1], [0], [0], [1], [0, 0, 1, 1], [], []>} : vector<8x27xbf16>, vector<27x512xbf16>, vector<8x512xf32> -> vector<8x512xf32>
    %c0_3 = arith.constant 0 : index
    %c0_4 = arith.constant 0 : index
    %3 = vector.load %arg2[%c0_3, %c0_4] : memref<8x1xf32, #tpu.memory_space<vmem>>, vector<8x1xf32>
    %4 = vector.broadcast %3 : vector<8x1xf32> to vector<8x512xf32>
    %5 = arith.addf %2, %4 : vector<8x512xf32>
    %cst_5 = arith.constant 0.000000e+00 : f32
    %6 = vector.broadcast %cst_5 : f32 to vector<8x512xf32>
    %7 = arith.maximumf %5, %6 : vector<8x512xf32>
    %c0_6 = arith.constant 0 : index
    %c0_7 = arith.constant 0 : index
    %8 = vector.load %arg4[%c0_6, %c0_7] : memref<8x512xf32, #tpu.memory_space<vmem>>, vector<8x512xf32>
    tpu.vector_store %arg4[%c0_6, %c0_7], %7 {strides = array<i32>} : memref<8x512xf32, #tpu.memory_space<vmem>>, vector<8x512xf32>,
    %c512_i32 = arith.constant 512 : i32
    %9 = arith.muli %arg0, %c512_i32 : i32
    %10 = tpu.iota {dimensions = array<i32: 1>} : vector<1x512xi32>
    %11 = vector.broadcast %9 : i32 to vector<1x512xi32>
    %12 = arith.addi %11, %10 : vector<1x512xi32>
    %c512_i32_8 = arith.constant 512 : i32
    %13 = vector.broadcast %c512_i32_8 : i32 to vector<1x512xi32>
    %14 = arith.cmpi slt, %12, %13 : vector<1x512xi32>
    %cst_9 = arith.constant 0.000000e+00 : f32
    %15 = vector.shape_cast %14 : vector<1x512xi1> to vector<1x512xi1>
    %16 = vector.broadcast %15 : vector<1x512xi1> to vector<8x512xi1>
    %17 = vector.broadcast %cst_9 : f32 to vector<8x512xf32>
    %18 = arith.select %16, %7, %17 : vector<8x512xi1>, vector<8x512xf32>
    %cst_10 = arith.constant dense<0.000000e+00> : vector<8xf32>
    %19 = vector.multi_reduction <add>, %18, %cst_10 [1] : vector<8x512xf32> to vector<8xf32>
    %20 = vector.shape_cast %19 : vector<8xf32> to vector<8x1xf32>
    %21 = vector.shape_cast %20 : vector<8x1xf32> to vector<1x8x1xf32>
    %c0_11 = arith.constant 0 : index
    %c0_12 = arith.constant 0 : index
    %c0_13 = arith.constant 0 : index
    %22 = vector.load %arg5[%c0_11, %c0_12, %c0_13] : memref<1x8x1xf32, #tpu.memory_space<vmem>>, vector<1x8x1xf32>
    tpu.vector_store %arg5[%c0_11, %c0_12, %c0_13], %21 {strides = array<i32>} : memref<1x8x1xf32, #tpu.memory_space<vmem>>, vector<1x8x1xf32>,
    %23 = arith.mulf %18, %18 : vector<8x512xf32>
    %cst_14 = arith.constant dense<0.000000e+00> : vector<8xf32>
    %24 = vector.multi_reduction <add>, %23, %cst_14 [1] : vector<8x512xf32> to vector<8xf32>
    %25 = vector.shape_cast %24 : vector<8xf32> to vector<8x1xf32>
    %26 = vector.shape_cast %25 : vector<8x1xf32> to vector<1x8x1xf32>
    %c0_15 = arith.constant 0 : index
    %c0_16 = arith.constant 0 : index
    %c0_17 = arith.constant 0 : index
    %27 = vector.load %arg6[%c0_15, %c0_16, %c0_17] : memref<1x8x1xf32, #tpu.memory_space<vmem>>, vector<1x8x1xf32>
    tpu.vector_store %arg6[%c0_15, %c0_16, %c0_17], %26 {strides = array<i32>} : memref<1x8x1xf32, #tpu.memory_space<vmem>>, vector<1x8x1xf32>,
    return
  }
  func.func @transform_0(%arg0: i32) -> (i32, i32) {
    %c0_i32 = arith.constant 0 : i32
    %c0_i32_0 = arith.constant 0 : i32
    %c0_i32_1 = arith.constant 0 : i32
    return %c0_i32, %c0_i32_0 : i32, i32
  }
  func.func @transform_1(%arg0: i32) -> (i32, i32) {
    %c0_i32 = arith.constant 0 : i32
    %c0_i32_0 = arith.constant 0 : i32
    %c0_i32_1 = arith.constant 0 : i32
    return %c0_i32, %c0_i32_0 : i32, i32
  }
  func.func @transform_2(%arg0: i32) -> (i32, i32) {
    %c0_i32 = arith.constant 0 : i32
    %c0_i32_0 = arith.constant 0 : i32
    return %c0_i32, %arg0 : i32, i32
  }
  func.func @transform_3(%arg0: i32) -> (i32, i32) {
    %c0_i32 = arith.constant 0 : i32
    %c0_i32_0 = arith.constant 0 : i32
    return %c0_i32, %arg0 : i32, i32
  }
  func.func @transform_4(%arg0: i32) -> (i32, i32, i32) {
    %c0_i32 = arith.constant 0 : i32
    %c0_i32_0 = arith.constant 0 : i32
    %c0_i32_1 = arith.constant 0 : i32
    return %arg0, %c0_i32, %c0_i32_0 : i32, i32, i32
  }
  func.func @transform_5(%arg0: i32) -> (i32, i32, i32) {
    %c0_i32 = arith.constant 0 : i32
    %c0_i32_0 = arith.constant 0 : i32
    %c0_i32_1 = arith.constant 0 : i32
    return %arg0, %c0_i32, %c0_i32_0 : i32, i32, i32
  }
}

module attributes {stable_mosaic.version = 11 : i64} {
  func.func @_conv_relu_stats_kernel(%arg0: i32, %arg1: memref<8x72xbf16, #tpu.memory_space<vmem>>, %arg2: memref<8x1xf32, #tpu.memory_space<vmem>>, %arg3: memref<72x512xbf16, #tpu.memory_space<vmem>>, %arg4: memref<8x512xf32, #tpu.memory_space<vmem>>, %arg5: memref<1x8x1xf32, #tpu.memory_space<vmem>>, %arg6: memref<1x8x1xf32, #tpu.memory_space<vmem>>) attributes {dimension_semantics = [#tpu.dimension_semantics<parallel>], iteration_bounds = array<i64: 1>, scalar_prefetch = 0 : i64, scratch_operands = 0 : i64, tpu.core_type = #tpu.core_type<tc>, window_params = [{pipeline_mode = #tpu.pipeline_mode<synchronous>, transform_indices = @transform_0, window_bounds = array<i64: 8, 72>}, {pipeline_mode = #tpu.pipeline_mode<synchronous>, transform_indices = @transform_1, window_bounds = array<i64: 8, 1>}, {transform_indices = @transform_2, window_bounds = array<i64: 72, 512>}, {transform_indices = @transform_3, window_bounds = array<i64: 8, 512>}, {transform_indices = @transform_4, window_bounds = array<i64: 1, 8, 1>}, {transform_indices = @transform_5, window_bounds = array<i64: 1, 8, 1>}]} {
    %c0 = arith.constant 0 : index
    %c0_0 = arith.constant 0 : index
    %0 = vector.load %arg1[%c0, %c0_0] : memref<8x72xbf16, #tpu.memory_space<vmem>>, vector<8x72xbf16>
    %c0_1 = arith.constant 0 : index
    %c0_2 = arith.constant 0 : index
    %1 = vector.load %arg3[%c0_1, %c0_2] : memref<72x512xbf16, #tpu.memory_space<vmem>>, vector<72x512xbf16>
    %cst = arith.constant dense<0.000000e+00> : vector<8x512xf32>
    %2 = tpu.matmul %0, %1, %cst {dimension_numbers = #tpu.dot_dimension_numbers<[1], [0], [0], [1], [0, 0, 1, 1], [], []>} : vector<8x72xbf16>, vector<72x512xbf16>, vector<8x512xf32> -> vector<8x512xf32>
    %c0_3 = arith.constant 0 : index
    %c0_4 = arith.constant 0 : index
    %3 = vector.load %arg2[%c0_3, %c0_4] : memref<8x1xf32, #tpu.memory_space<vmem>>, vector<8x1xf32>
    %4 = vector.broadcast %3 : vector<8x1xf32> to vector<8x512xf32>
    %5 = arith.addf %2, %4 : vector<8x512xf32>
    %cst_5 = arith.constant 0.000000e+00 : f32
    %6 = vector.broadcast %cst_5 : f32 to vector<8x512xf32>
    %7 = arith.maximumf %5, %6 : vector<8x512xf32>
    %c0_6 = arith.constant 0 : index
    %c0_7 = arith.constant 0 : index
    %8 = vector.load %arg4[%c0_6, %c0_7] : memref<8x512xf32, #tpu.memory_space<vmem>>, vector<8x512xf32>
    tpu.vector_store %arg4[%c0_6, %c0_7], %7 {strides = array<i32>} : memref<8x512xf32, #tpu.memory_space<vmem>>, vector<8x512xf32>,
    %c512_i32 = arith.constant 512 : i32
    %9 = arith.muli %arg0, %c512_i32 : i32
    %10 = tpu.iota {dimensions = array<i32: 1>} : vector<1x512xi32>
    %11 = vector.broadcast %9 : i32 to vector<1x512xi32>
    %12 = arith.addi %11, %10 : vector<1x512xi32>
    %c512_i32_8 = arith.constant 512 : i32
    %13 = vector.broadcast %c512_i32_8 : i32 to vector<1x512xi32>
    %14 = arith.cmpi slt, %12, %13 : vector<1x512xi32>
    %cst_9 = arith.constant 0.000000e+00 : f32
    %15 = vector.shape_cast %14 : vector<1x512xi1> to vector<1x512xi1>
    %16 = vector.broadcast %15 : vector<1x512xi1> to vector<8x512xi1>
    %17 = vector.broadcast %cst_9 : f32 to vector<8x512xf32>
    %18 = arith.select %16, %7, %17 : vector<8x512xi1>, vector<8x512xf32>
    %cst_10 = arith.constant dense<0.000000e+00> : vector<8xf32>
    %19 = vector.multi_reduction <add>, %18, %cst_10 [1] : vector<8x512xf32> to vector<8xf32>
    %20 = vector.shape_cast %19 : vector<8xf32> to vector<8x1xf32>
    %21 = vector.shape_cast %20 : vector<8x1xf32> to vector<1x8x1xf32>
    %c0_11 = arith.constant 0 : index
    %c0_12 = arith.constant 0 : index
    %c0_13 = arith.constant 0 : index
    %22 = vector.load %arg5[%c0_11, %c0_12, %c0_13] : memref<1x8x1xf32, #tpu.memory_space<vmem>>, vector<1x8x1xf32>
    tpu.vector_store %arg5[%c0_11, %c0_12, %c0_13], %21 {strides = array<i32>} : memref<1x8x1xf32, #tpu.memory_space<vmem>>, vector<1x8x1xf32>,
    %23 = arith.mulf %18, %18 : vector<8x512xf32>
    %cst_14 = arith.constant dense<0.000000e+00> : vector<8xf32>
    %24 = vector.multi_reduction <add>, %23, %cst_14 [1] : vector<8x512xf32> to vector<8xf32>
    %25 = vector.shape_cast %24 : vector<8xf32> to vector<8x1xf32>
    %26 = vector.shape_cast %25 : vector<8x1xf32> to vector<1x8x1xf32>
    %c0_15 = arith.constant 0 : index
    %c0_16 = arith.constant 0 : index
    %c0_17 = arith.constant 0 : index
    %27 = vector.load %arg6[%c0_15, %c0_16, %c0_17] : memref<1x8x1xf32, #tpu.memory_space<vmem>>, vector<1x8x1xf32>
    tpu.vector_store %arg6[%c0_15, %c0_16, %c0_17], %26 {strides = array<i32>} : memref<1x8x1xf32, #tpu.memory_space<vmem>>, vector<1x8x1xf32>,
    return
  }
  func.func @transform_0(%arg0: i32) -> (i32, i32) {
    %c0_i32 = arith.constant 0 : i32
    %c0_i32_0 = arith.constant 0 : i32
    %c0_i32_1 = arith.constant 0 : i32
    return %c0_i32, %c0_i32_0 : i32, i32
  }
  func.func @transform_1(%arg0: i32) -> (i32, i32) {
    %c0_i32 = arith.constant 0 : i32
    %c0_i32_0 = arith.constant 0 : i32
    %c0_i32_1 = arith.constant 0 : i32
    return %c0_i32, %c0_i32_0 : i32, i32
  }
  func.func @transform_2(%arg0: i32) -> (i32, i32) {
    %c0_i32 = arith.constant 0 : i32
    %c0_i32_0 = arith.constant 0 : i32
    return %c0_i32, %arg0 : i32, i32
  }
  func.func @transform_3(%arg0: i32) -> (i32, i32) {
    %c0_i32 = arith.constant 0 : i32
    %c0_i32_0 = arith.constant 0 : i32
    return %c0_i32, %arg0 : i32, i32
  }
  func.func @transform_4(%arg0: i32) -> (i32, i32, i32) {
    %c0_i32 = arith.constant 0 : i32
    %c0_i32_0 = arith.constant 0 : i32
    %c0_i32_1 = arith.constant 0 : i32
    return %arg0, %c0_i32, %c0_i32_0 : i32, i32, i32
  }
  func.func @transform_5(%arg0: i32) -> (i32, i32, i32) {
    %c0_i32 = arith.constant 0 : i32
    %c0_i32_0 = arith.constant 0 : i32
    %c0_i32_1 = arith.constant 0 : i32
    return %arg0, %c0_i32, %c0_i32_0 : i32, i32, i32
  }
}

</mosaic_0001>

<llo_original>
// kernel: unet_conv_block.2
$region0: #{unet_conv_block.2}
  #allocation0 [shape = 'u32[]', space=smem, size = 0x4, offset = 0x4, fixed_abs, tag = 'smem constant byte address 0x4 - core index']
  #allocation1 [shape = 'u32[144,128]{1,0:T(1,128)}', space=vmem, size = 0x12000, scoped, tag = 'internal scratch']
  %s0 = inlined_call_operand.vmem [shape: bf16[8,27], index: 0, kind: input, shape index: {}]
  %s1 = inlined_call_operand.vmem [shape: f32[8,1], index: 1, kind: input, shape index: {}]
  %s2 = inlined_call_operand.vmem [shape: bf16[27,512], index: 2, kind: input, shape index: {}]
  %s3 = inlined_call_operand.vmem [shape: f32[8,512], index: 3, kind: output, shape index: {0}]
  %s4 = inlined_call_operand.vmem [shape: f32[1,8,1], index: 4, kind: output, shape index: {1}]
  %s5 = inlined_call_operand.vmem [shape: f32[1,8,1], index: 5, kind: output, shape index: {2}]
  %6 = xla_tuple %s3, %s4, %s5
  %s7 = sld [smem:[#allocation0]]
  $region38: #{unet_conv_block.2} parent=0
    _
  %s9 = ssub.s32 1, %s7
  %s10 = scalar_select 0, %s9, %s7
  // Predicated region
  $region2: #{unet_conv_block.2} parent=0 // pred_check
    _
  $region3: #{unet_conv_block.2} parent=0 // pred_check_branch
    %12 = sbr.rel (0) target = $region5
  $region4: #{unet_conv_block.2} parent=0 // pred_region
    _
  $region5: #{unet_conv_block.2} parent=0 // pred_fallthru
    _
  // Predicated region
  $region6: #{unet_conv_block.2} parent=0 // pred_check
    _
  $region7: #{unet_conv_block.2} parent=0 // pred_check_branch
    %14 = sbr.rel (0) target = $region9
  $region8: #{unet_conv_block.2} parent=0 // pred_region
    _
  $region9: #{unet_conv_block.2} parent=0 // pred_fallthru
    _
  // Predicated region
  $region10: #{unet_conv_block.2} parent=0 // pred_check
    _
  $region11: #{unet_conv_block.2} parent=0 // pred_check_branch
    %16 = sbr.rel (0) target = $region13
  $region12: #{unet_conv_block.2} parent=0 // pred_region
    _
  $region13: #{unet_conv_block.2} parent=0 // pred_fallthru
    _
  %v18 = vld [vmem:[%s0] sm:$0xf]
  %v19 = vld [vmem:[%s2] sm:$0xff]
  %v20 = vld [vmem:[%s2 + $0x8] sm:$0xff]
  %v21 = vld [vmem:[%s2 + $0x10] sm:$0xff]
  %v22 = vld [vmem:[%s2 + $0x18] sm:$0xff]
  %v23 = vld [vmem:[%s2 + $0x20] sm:$0xff]
  %v24 = vld [vmem:[%s2 + $0x28] sm:$0xff]
  %v25 = vld [vmem:[%s2 + $0x30] sm:$0x33]
  %v26 = vld [vmem:[%s2 + $0x38] sm:$0x33]
  %v27 = vld [vmem:[%s1] sm:$0xff]
  %29 = vset.pattern.permute.xlu0 0
  %30 = vperm.xlu0 %29, %v27
  %v31 = vpop.permute.xlu0 %30
  %v41 = vunpack.c.l.b16 %v19
  %v42 = vunpack.c.h.b16 %v19
  %v43 = vunpack.c.l.b16 %v20
  %v44 = vunpack.c.h.b16 %v20
  %v45 = vunpack.c.l.b16 %v21
  %v46 = vunpack.c.h.b16 %v21
  %v47 = vunpack.c.l.b16 %v22
  %v48 = vunpack.c.h.b16 %v22
  %v49 = vunpack.c.l.b16 %v23
  %v50 = vunpack.c.h.b16 %v23
  %v51 = vunpack.c.l.b16 %v24
  %v52 = vunpack.c.h.b16 %v24
  %v53 = vunpack.c.l.b16 %v25
  %v54 = vunpack.c.h.b16 %v25
  %v55 = vunpack.c.l.b16 %v26
  %v56 = vunpack.c.h.b16 %v26
  %v57 = vpack.c.b16 %v45, %v41
  %v58 = vpack.c.b16 %v46, %v42
  %v59 = vpack.c.b16 %v47, %v43
  %v60 = vpack.c.b16 %v48, %v44
  %v61 = vpack.c.b16 %v53, %v49
  %v62 = vpack.c.b16 %v54, %v50
  %v63 = vpack.c.b16 %v55, %v51
  %v64 = vpack.c.b16 %v56, %v52
  %vm69 = vcmask 220160
  %v71 = vsel %vm69, %v18, 0
  %vm73 = vcmask 1044480
  %vm74 = vcmask 1045504
  %v75 = vsel %vm73, 4294967295, 65535
  %v76 = vsel %vm74, %v75, 0
  %v78 = vand.u32 %v61, %v76
  %v81 = vand.u32 %v62, %v76
  %v84 = vand.u32 %v63, %v76
  %v87 = vand.u32 %v64, %v76
  %89 = vmatprep.subr.bf16.mxu0 0
  %90 = vmatpush1.bf16.msra.mxu0 0
  %91 = vmatprep.subr.bf16.mxu0 0
  %92 = vmatpush1.bf16.msra.mxu0 0
  %93 = vmatprep.subr.bf16.mxu0 0
  %94 = vmatpush1.bf16.msra.mxu0 0
  %95 = vmatprep.subr.bf16.mxu0 0
  %96 = vmatpush1.bf16.msra.mxu0 0
  %97 = vmatprep.subr.bf16.mxu0 0
  %98 = vmatpush1.bf16.msra.mxu0 0
  %99 = vmatprep.subr.bf16.mxu0 0
  %100 = vmatpush1.bf16.msra.mxu0 0
  %101 = vmatprep.subr.bf16.mxu0 %v81
  %102 = vmatpush1.bf16.msra.mxu0 %v78
  %103 = vmatprep.subr.bf16.mxu0 %v58
  %104 = vmatpush1.bf16.msra.mxu0 %v57
  %105 = vmatprep.subr.bf16.mxu0 0
  %106 = vmatpush2.bf16.msra.mxu0 0
  %107 = vmatprep.subr.bf16.mxu0 0
  %108 = vmatpush2.bf16.msra.mxu0 0
  %109 = vmatprep.subr.bf16.mxu0 0
  %110 = vmatpush2.bf16.msra.mxu0 0
  %111 = vmatprep.subr.bf16.mxu0 0
  %112 = vmatpush2.bf16.msra.mxu0 0
  %113 = vmatprep.subr.bf16.mxu0 0
  %114 = vmatpush2.bf16.msra.mxu0 0
  %115 = vmatprep.subr.bf16.mxu0 0
  %116 = vmatpush2.bf16.msra.mxu0 0
  %117 = vmatprep.subr.bf16.mxu0 0
  %118 = vmatpush2.bf16.msra.mxu0 0
  %119 = vmatprep.subr.bf16.mxu0 0
  %120 = vmatpush2.bf16.msra.mxu0 0
  %121 = vmatprep.mubr.bf16.mxu0 0
  %122 = vmatmul.mubr.bf16.gmra.mxu0 %v71
  %v123 = vpop.f32.mrf.mxu0
  %v124 = vadd.f32 %v31, %v123
  %v125 = vpop.f32.mrf.mxu0
  %v126 = vadd.f32 %v31, %v125
  %v127 = vpop.f32.mrf.mxu0
  %v128 = vpop.f32.mrf.mxu0
  %129 = vdwg.mxu0
  %130 = vmatprep.subr.bf16.mxu0 0
  %131 = vmatpush1.bf16.msra.mxu0 0
  %132 = vmatprep.subr.bf16.mxu0 0
  %133 = vmatpush1.bf16.msra.mxu0 0
  %134 = vmatprep.subr.bf16.mxu0 0
  %135 = vmatpush1.bf16.msra.mxu0 0
  %136 = vmatprep.subr.bf16.mxu0 0
  %137 = vmatpush1.bf16.msra.mxu0 0
  %138 = vmatprep.subr.bf16.mxu0 0
  %139 = vmatpush1.bf16.msra.mxu0 0
  %140 = vmatprep.subr.bf16.mxu0 0
  %141 = vmatpush1.bf16.msra.mxu0 0
  %142 = vmatprep.subr.bf16.mxu0 %v87
  %143 = vmatpush1.bf16.msra.mxu0 %v84
  %144 = vmatprep.subr.bf16.mxu0 %v60
  %145 = vmatpush1.bf16.msra.mxu0 %v59
  %146 = vmatprep.subr.bf16.mxu0 0
  %147 = vmatpush2.bf16.msra.mxu0 0
  %148 = vmatprep.subr.bf16.mxu0 0
  %149 = vmatpush2.bf16.msra.mxu0 0
  %150 = vmatprep.subr.bf16.mxu0 0
  %151 = vmatpush2.bf16.msra.mxu0 0
  %152 = vmatprep.subr.bf16.mxu0 0
  %153 = vmatpush2.bf16.msra.mxu0 0
  %154 = vmatprep.subr.bf16.mxu0 0
  %155 = vmatpush2.bf16.msra.mxu0 0
  %156 = vmatprep.subr.bf16.mxu0 0
  %157 = vmatpush2.bf16.msra.mxu0 0
  %158 = vmatprep.subr.bf16.mxu0 0
  %159 = vmatpush2.bf16.msra.mxu0 0
  %160 = vmatprep.subr.bf16.mxu0 0
  %161 = vmatpush2.bf16.msra.mxu0 0
  %162 = vmatprep.mubr.bf16.mxu0 0
  %163 = vmatmul.mubr.bf16.gmra.mxu0 %v71
  %v164 = vpop.f32.mrf.mxu0
  %v165 = vadd.f32 %v31, %v164
  %v166 = vpop.f32.mrf.mxu0
  %v167 = vadd.f32 %v31, %v166
  %v168 = vpop.f32.mrf.mxu0
  %v169 = vpop.f32.mrf.mxu0
  %170 = vdwg.mxu0
  %v171 = vmax.f32 %v124, 0.0
  %v172 = vmax.f32 %v126, 0.0
  %v173 = vmax.f32 %v165, 0.0
  %v174 = vmax.f32 %v167, 0.0
  %175 = vst [vmem:[%s3] sm:$0xff] %v171
  %176 = vst [vmem:[%s3 + $0x8] sm:$0xff] %v172
  %177 = vst [vmem:[%s3 + $0x10] sm:$0xff] %v173
  %178 = vst [vmem:[%s3 + $0x18] sm:$0xff] %v174
  %s179 = smul.u32 0, 512
  %v180 = vlaneseq
  %v181 = vand.u32 %v180, 127
  %v182 = vadd.s32 %v181, 128
  %v183 = vadd.s32 %v181, 256
  %v184 = vadd.s32 %v181, 384
  %v185 = vstv %s179
  %v186 = vadd.s32 %v185, %v181
  %v187 = vadd.s32 %v185, %v182
  %v188 = vadd.s32 %v185, %v183
  %v189 = vadd.s32 %v185, %v184
  %vm190 = vcmp.lt.s32.totalorder %v186, 512
  %vm191 = vcmp.lt.s32.totalorder %v187, 512
  %vm192 = vcmp.lt.s32.totalorder %v188, 512
  %vm193 = vcmp.lt.s32.totalorder %v189, 512
  %v194 = vsel %vm190, 1, 0
  %v195 = vsel %vm191, 1, 0
  %v196 = vsel %vm192, 1, 0
  %v197 = vsel %vm193, 1, 0
  %vm198 = vcmp.eq.s32.totalorder %v194, 1
  %vm199 = vcmp.eq.s32.totalorder %v195, 1
  %vm200 = vcmp.eq.s32.totalorder %v196, 1
  %vm201 = vcmp.eq.s32.totalorder %v197, 1
  %v202 = vsel %vm198, %v171, 0.0
  %v203 = vsel %vm199, %v172, 0.0
  %v204 = vsel %vm200, %v173, 0.0
  %v205 = vsel %vm201, %v174, 0.0
  %v206 = vadd.f32 %v202, %v203
  %v207 = vadd.f32 %v206, %v204
  %v208 = vadd.f32 %v207, %v205
  %209 = vadd.xlane.f32.xlu0 %v208
  %v210 = vpop.xlane.xlu0 %209
  %vm211 = vcmask 7168
  %212 = vst.msk [vmem:[%s4] sm:$0xff] %vm211, %v210
  %v213 = vmul.f32 %v202, %v202
  %v214 = vmul.f32 %v203, %v203
  %v215 = vmul.f32 %v204, %v204
  %v216 = vmul.f32 %v205, %v205
  %v217 = vadd.f32 %v213, %v214
  %v218 = vadd.f32 %v217, %v215
  %v219 = vadd.f32 %v218, %v216
  %220 = vadd.xlane.f32.xlu0 %v219
  %v221 = vpop.xlane.xlu0 %220
  %222 = vst.msk [vmem:[%s5] sm:$0xff] %vm211, %v221
  // Predicated region
  $region14: #{unet_conv_block.2} parent=0 // pred_check
    _
  $region15: #{unet_conv_block.2} parent=0 // pred_check_branch
    %224 = sbr.rel (0) target = $region17
  $region16: #{unet_conv_block.2} parent=0 // pred_region
    _
  $region17: #{unet_conv_block.2} parent=0 // pred_fallthru
    _
  // Predicated region
  $region18: #{unet_conv_block.2} parent=0 // pred_check
    _
  $region19: #{unet_conv_block.2} parent=0 // pred_check_branch
    %226 = sbr.rel (0) target = $region21
  $region20: #{unet_conv_block.2} parent=0 // pred_region
    _
  $region21: #{unet_conv_block.2} parent=0 // pred_fallthru
    _
  // Predicated region
  $region22: #{unet_conv_block.2} parent=0 // pred_check
    _
  $region23: #{unet_conv_block.2} parent=0 // pred_check_branch
    %228 = sbr.rel (0) target = $region25
  $region24: #{unet_conv_block.2} parent=0 // pred_region
    _
  $region25: #{unet_conv_block.2} parent=0 // pred_fallthru
    _
  // Predicated region
  $region26: #{unet_conv_block.2} parent=0 // pred_check
    _
  $region27: #{unet_conv_block.2} parent=0 // pred_check_branch
    %230 = sbr.rel (0) target = $region29
  $region28: #{unet_conv_block.2} parent=0 // pred_region
    _
  $region29: #{unet_conv_block.2} parent=0 // pred_fallthru
    _
  // Predicated region
  $region30: #{unet_conv_block.2} parent=0 // pred_check
    _
  $region31: #{unet_conv_block.2} parent=0 // pred_check_branch
    %232 = sbr.rel (0) target = $region33
  $region32: #{unet_conv_block.2} parent=0 // pred_region
    _
  $region33: #{unet_conv_block.2} parent=0 // pred_fallthru
    _
  // Predicated region
  $region34: #{unet_conv_block.2} parent=0 // pred_check
    _
  $region35: #{unet_conv_block.2} parent=0 // pred_check_branch
    %234 = sbr.rel (0) target = $region37
  $region36: #{unet_conv_block.2} parent=0 // pred_region
    _
  $region37: #{unet_conv_block.2} parent=0 // pred_fallthru
    _

// kernel: unet_conv_block.3
$region0: #{unet_conv_block.3}
  #allocation0 [shape = 'u32[]', space=smem, size = 0x4, offset = 0x4, fixed_abs, tag = 'smem constant byte address 0x4 - core index']
  #allocation1 [shape = 'u32[144,128]{1,0:T(1,128)}', space=vmem, size = 0x12000, scoped, tag = 'internal scratch']
  %s0 = inlined_call_operand.vmem [shape: bf16[8,72], index: 0, kind: input, shape index: {}]
  %s1 = inlined_call_operand.vmem [shape: f32[8,1], index: 1, kind: input, shape index: {}]
  %s2 = inlined_call_operand.vmem [shape: bf16[72,512], index: 2, kind: input, shape index: {}]
  %s3 = inlined_call_operand.vmem [shape: f32[8,512], index: 3, kind: output, shape index: {0}]
  %s4 = inlined_call_operand.vmem [shape: f32[1,8,1], index: 4, kind: output, shape index: {1}]
  %s5 = inlined_call_operand.vmem [shape: f32[1,8,1], index: 5, kind: output, shape index: {2}]
  %6 = xla_tuple %s3, %s4, %s5
  %s7 = sld [smem:[#allocation0]]
  $region38: #{unet_conv_block.3} parent=0
    _
  %s9 = ssub.s32 1, %s7
  %s10 = scalar_select 0, %s9, %s7
  // Predicated region
  $region2: #{unet_conv_block.3} parent=0 // pred_check
    _
  $region3: #{unet_conv_block.3} parent=0 // pred_check_branch
    %12 = sbr.rel (0) target = $region5
  $region4: #{unet_conv_block.3} parent=0 // pred_region
    _
  $region5: #{unet_conv_block.3} parent=0 // pred_fallthru
    _
  // Predicated region
  $region6: #{unet_conv_block.3} parent=0 // pred_check
    _
  $region7: #{unet_conv_block.3} parent=0 // pred_check_branch
    %14 = sbr.rel (0) target = $region9
  $region8: #{unet_conv_block.3} parent=0 // pred_region
    _
  $region9: #{unet_conv_block.3} parent=0 // pred_fallthru
    _
  // Predicated region
  $region10: #{unet_conv_block.3} parent=0 // pred_check
    _
  $region11: #{unet_conv_block.3} parent=0 // pred_check_branch
    %16 = sbr.rel (0) target = $region13
  $region12: #{unet_conv_block.3} parent=0 // pred_region
    _
  $region13: #{unet_conv_block.3} parent=0 // pred_fallthru
    _
  %v18 = vld [vmem:[%s0] sm:$0xf]
  %v19 = vld [vmem:[%s2] sm:$0xff]
  %v20 = vld [vmem:[%s2 + $0x8] sm:$0xff]
  %v21 = vld [vmem:[%s2 + $0x10] sm:$0xff]
  %v22 = vld [vmem:[%s2 + $0x18] sm:$0xff]
  %v23 = vld [vmem:[%s2 + $0x20] sm:$0xff]
  %v24 = vld [vmem:[%s2 + $0x28] sm:$0xff]
  %v25 = vld [vmem:[%s2 + $0x30] sm:$0xff]
  %v26 = vld [vmem:[%s2 + $0x38] sm:$0xff]
  %v27 = vld [vmem:[%s2 + $0x40] sm:$0xff]
  %v28 = vld [vmem:[%s2 + $0x48] sm:$0xff]
  %v29 = vld [vmem:[%s2 + $0x50] sm:$0xff]
  %v30 = vld [vmem:[%s2 + $0x58] sm:$0xff]
  %v31 = vld [vmem:[%s2 + $0x60] sm:$0xff]
  %v32 = vld [vmem:[%s2 + $0x68] sm:$0xff]
  %v33 = vld [vmem:[%s2 + $0x70] sm:$0xff]
  %v34 = vld [vmem:[%s2 + $0x78] sm:$0xff]
  %v35 = vld [vmem:[%s2 + $0x80] sm:$0xff]
  %v36 = vld [vmem:[%s2 + $0x88] sm:$0xff]
  %v37 = vld [vmem:[%s1] sm:$0xff]
  %39 = vset.pattern.permute.xlu0 0
  %40 = vperm.xlu0 %39, %v37
  %v41 = vpop.permute.xlu0 %40
  %v61 = vunpack.c.l.b16 %v19
  %v62 = vunpack.c.h.b16 %v19
  %v63 = vunpack.c.l.b16 %v20
  %v64 = vunpack.c.h.b16 %v20
  %v65 = vunpack.c.l.b16 %v21
  %v66 = vunpack.c.h.b16 %v21
  %v67 = vunpack.c.l.b16 %v22
  %v68 = vunpack.c.h.b16 %v22
  %v69 = vunpack.c.l.b16 %v23
  %v70 = vunpack.c.h.b16 %v23
  %v71 = vunpack.c.l.b16 %v24
  %v72 = vunpack.c.h.b16 %v24
  %v73 = vunpack.c.l.b16 %v25
  %v74 = vunpack.c.h.b16 %v25
  %v75 = vunpack.c.l.b16 %v26
  %v76 = vunpack.c.h.b16 %v26
  %v77 = vunpack.c.l.b16 %v27
  %v78 = vunpack.c.h.b16 %v27
  %v79 = vunpack.c.l.b16 %v28
  %v80 = vunpack.c.h.b16 %v28
  %v81 = vunpack.c.l.b16 %v29
  %v82 = vunpack.c.h.b16 %v29
  %v83 = vunpack.c.l.b16 %v30
  %v84 = vunpack.c.h.b16 %v30
  %v85 = vunpack.c.l.b16 %v31
  %v86 = vunpack.c.h.b16 %v31
  %v87 = vunpack.c.l.b16 %v32
  %v88 = vunpack.c.h.b16 %v32
  %v89 = vunpack.c.l.b16 %v33
  %v90 = vunpack.c.h.b16 %v33
  %v91 = vunpack.c.l.b16 %v34
  %v92 = vunpack.c.h.b16 %v34
  %v93 = vunpack.c.l.b16 %v35
  %v94 = vunpack.c.h.b16 %v35
  %v95 = vunpack.c.l.b16 %v36
  %v96 = vunpack.c.h.b16 %v36
  %v97 = vpack.c.b16 %v65, %v61
  %v98 = vpack.c.b16 %v66, %v62
  %v99 = vpack.c.b16 %v67, %v63
  %v100 = vpack.c.b16 %v68, %v64
  %v101 = vpack.c.b16 %v73, %v69
  %v102 = vpack.c.b16 %v74, %v70
  %v103 = vpack.c.b16 %v75, %v71
  %v104 = vpack.c.b16 %v76, %v72
  %v105 = vpack.c.b16 %v81, %v77
  %v106 = vpack.c.b16 %v82, %v78
  %v107 = vpack.c.b16 %v83, %v79
  %v108 = vpack.c.b16 %v84, %v80
  %v109 = vpack.c.b16 %v89, %v85
  %v110 = vpack.c.b16 %v90, %v86
  %v111 = vpack.c.b16 %v91, %v87
  %v112 = vpack.c.b16 %v92, %v88
  %v113 = vpack.c.b16 %v93, %v93
  %v114 = vpack.c.b16 %v94, %v94
  %v115 = vpack.c.b16 %v95, %v95
  %v116 = vpack.c.b16 %v96, %v96
  %vm133 = vcmask 588800
  %v135 = vsel %vm133, %v18, 0
  %vm137 = vcmask 1043456
  %v139 = vsel %vm137, %v113, 0
  %v142 = vsel %vm137, %v114, 0
  %v145 = vsel %vm137, %v115, 0
  %v148 = vsel %vm137, %v116, 0
  %150 = vmatprep.subr.bf16.mxu0 0
  %151 = vmatpush1.bf16.msra.mxu0 0
  %152 = vmatprep.subr.bf16.mxu0 0
  %153 = vmatpush1.bf16.msra.mxu0 0
  %154 = vmatprep.subr.bf16.mxu0 0
  %155 = vmatpush1.bf16.msra.mxu0 0
  %156 = vmatprep.subr.bf16.mxu0 %v142
  %157 = vmatpush1.bf16.msra.mxu0 %v139
  %158 = vmatprep.subr.bf16.mxu0 %v110
  %159 = vmatpush1.bf16.msra.mxu0 %v109
  %160 = vmatprep.subr.bf16.mxu0 %v106
  %161 = vmatpush1.bf16.msra.mxu0 %v105
  %162 = vmatprep.subr.bf16.mxu0 %v102
  %163 = vmatpush1.bf16.msra.mxu0 %v101
  %164 = vmatprep.subr.bf16.mxu0 %v98
  %165 = vmatpush1.bf16.msra.mxu0 %v97
  %166 = vmatprep.subr.bf16.mxu0 0
  %167 = vmatpush2.bf16.msra.mxu0 0
  %168 = vmatprep.subr.bf16.mxu0 0
  %169 = vmatpush2.bf16.msra.mxu0 0
  %170 = vmatprep.subr.bf16.mxu0 0
  %171 = vmatpush2.bf16.msra.mxu0 0
  %172 = vmatprep.subr.bf16.mxu0 0
  %173 = vmatpush2.bf16.msra.mxu0 0
  %174 = vmatprep.subr.bf16.mxu0 0
  %175 = vmatpush2.bf16.msra.mxu0 0
  %176 = vmatprep.subr.bf16.mxu0 0
  %177 = vmatpush2.bf16.msra.mxu0 0
  %178 = vmatprep.subr.bf16.mxu0 0
  %179 = vmatpush2.bf16.msra.mxu0 0
  %180 = vmatprep.subr.bf16.mxu0 0
  %181 = vmatpush2.bf16.msra.mxu0 0
  %182 = vmatprep.mubr.bf16.mxu0 0
  %183 = vmatmul.mubr.bf16.gmra.mxu0 %v135
  %v184 = vpop.f32.mrf.mxu0
  %v185 = vadd.f32 %v41, %v184
  %v186 = vpop.f32.mrf.mxu0
  %v187 = vadd.f32 %v41, %v186
  %v188 = vpop.f32.mrf.mxu0
  %v189 = vpop.f32.mrf.mxu0
  %190 = vdwg.mxu0
  %191 = vmatprep.subr.bf16.mxu0 0
  %192 = vmatpush1.bf16.msra.mxu0 0
  %193 = vmatprep.subr.bf16.mxu0 0
  %194 = vmatpush1.bf16.msra.mxu0 0
  %195 = vmatprep.subr.bf16.mxu0 0
  %196 = vmatpush1.bf16.msra.mxu0 0
  %197 = vmatprep.subr.bf16.mxu0 %v148
  %198 = vmatpush1.bf16.msra.mxu0 %v145
  %199 = vmatprep.subr.bf16.mxu0 %v112
  %200 = vmatpush1.bf16.msra.mxu0 %v111
  %201 = vmatprep.subr.bf16.mxu0 %v108
  %202 = vmatpush1.bf16.msra.mxu0 %v107
  %203 = vmatprep.subr.bf16.mxu0 %v104
  %204 = vmatpush1.bf16.msra.mxu0 %v103
  %205 = vmatprep.subr.bf16.mxu0 %v100
  %206 = vmatpush1.bf16.msra.mxu0 %v99
  %207 = vmatprep.subr.bf16.mxu0 0
  %208 = vmatpush2.bf16.msra.mxu0 0
  %209 = vmatprep.subr.bf16.mxu0 0
  %210 = vmatpush2.bf16.msra.mxu0 0
  %211 = vmatprep.subr.bf16.mxu0 0
  %212 = vmatpush2.bf16.msra.mxu0 0
  %213 = vmatprep.subr.bf16.mxu0 0
  %214 = vmatpush2.bf16.msra.mxu0 0
  %215 = vmatprep.subr.bf16.mxu0 0
  %216 = vmatpush2.bf16.msra.mxu0 0
  %217 = vmatprep.subr.bf16.mxu0 0
  %218 = vmatpush2.bf16.msra.mxu0 0
  %219 = vmatprep.subr.bf16.mxu0 0
  %220 = vmatpush2.bf16.msra.mxu0 0
  %221 = vmatprep.subr.bf16.mxu0 0
  %222 = vmatpush2.bf16.msra.mxu0 0
  %223 = vmatprep.mubr.bf16.mxu0 0
  %224 = vmatmul.mubr.bf16.gmra.mxu0 %v135
  %v225 = vpop.f32.mrf.mxu0
  %v226 = vadd.f32 %v41, %v225
  %v227 = vpop.f32.mrf.mxu0
  %v228 = vadd.f32 %v41, %v227
  %v229 = vpop.f32.mrf.mxu0
  %v230 = vpop.f32.mrf.mxu0
  %231 = vdwg.mxu0
  %v232 = vmax.f32 %v185, 0.0
  %v233 = vmax.f32 %v187, 0.0
  %v234 = vmax.f32 %v226, 0.0
  %v235 = vmax.f32 %v228, 0.0
  %236 = vst [vmem:[%s3] sm:$0xff] %v232
  %237 = vst [vmem:[%s3 + $0x8] sm:$0xff] %v233
  %238 = vst [vmem:[%s3 + $0x10] sm:$0xff] %v234
  %239 = vst [vmem:[%s3 + $0x18] sm:$0xff] %v235
  %s240 = smul.u32 0, 512
  %v241 = vlaneseq
  %v242 = vand.u32 %v241, 127
  %v243 = vadd.s32 %v242, 128
  %v244 = vadd.s32 %v242, 256
  %v245 = vadd.s32 %v242, 384
  %v246 = vstv %s240
  %v247 = vadd.s32 %v246, %v242
  %v248 = vadd.s32 %v246, %v243
  %v249 = vadd.s32 %v246, %v244
  %v250 = vadd.s32 %v246, %v245
  %vm251 = vcmp.lt.s32.totalorder %v247, 512
  %vm252 = vcmp.lt.s32.totalorder %v248, 512
  %vm253 = vcmp.lt.s32.totalorder %v249, 512
  %vm254 = vcmp.lt.s32.totalorder %v250, 512
  %v255 = vsel %vm251, 1, 0
  %v256 = vsel %vm252, 1, 0
  %v257 = vsel %vm253, 1, 0
  %v258 = vsel %vm254, 1, 0
  %vm259 = vcmp.eq.s32.totalorder %v255, 1
  %vm260 = vcmp.eq.s32.totalorder %v256, 1
  %vm261 = vcmp.eq.s32.totalorder %v257, 1
  %vm262 = vcmp.eq.s32.totalorder %v258, 1
  %v263 = vsel %vm259, %v232, 0.0
  %v264 = vsel %vm260, %v233, 0.0
  %v265 = vsel %vm261, %v234, 0.0
  %v266 = vsel %vm262, %v235, 0.0
  %v267 = vadd.f32 %v263, %v264
  %v268 = vadd.f32 %v267, %v265
  %v269 = vadd.f32 %v268, %v266
  %270 = vadd.xlane.f32.xlu0 %v269
  %v271 = vpop.xlane.xlu0 %270
  %vm272 = vcmask 7168
  %273 = vst.msk [vmem:[%s4] sm:$0xff] %vm272, %v271
  %v274 = vmul.f32 %v263, %v263
  %v275 = vmul.f32 %v264, %v264
  %v276 = vmul.f32 %v265, %v265
  %v277 = vmul.f32 %v266, %v266
  %v278 = vadd.f32 %v274, %v275
  %v279 = vadd.f32 %v278, %v276
  %v280 = vadd.f32 %v279, %v277
  %281 = vadd.xlane.f32.xlu0 %v280
  %v282 = vpop.xlane.xlu0 %281
  %283 = vst.msk [vmem:[%s5] sm:$0xff] %vm272, %v282
  // Predicated region
  $region14: #{unet_conv_block.3} parent=0 // pred_check
    _
  $region15: #{unet_conv_block.3} parent=0 // pred_check_branch
    %285 = sbr.rel (0) target = $region17
  $region16: #{unet_conv_block.3} parent=0 // pred_region
    _
  $region17: #{unet_conv_block.3} parent=0 // pred_fallthru
    _
  // Predicated region
  $region18: #{unet_conv_block.3} parent=0 // pred_check
    _
  $region19: #{unet_conv_block.3} parent=0 // pred_check_branch
    %287 = sbr.rel (0) target = $region21
  $region20: #{unet_conv_block.3} parent=0 // pred_region
    _
  $region21: #{unet_conv_block.3} parent=0 // pred_fallthru
    _
  // Predicated region
  $region22: #{unet_conv_block.3} parent=0 // pred_check
    _
  $region23: #{unet_conv_block.3} parent=0 // pred_check_branch
    %289 = sbr.rel (0) target = $region25
  $region24: #{unet_conv_block.3} parent=0 // pred_region
    _
  $region25: #{unet_conv_block.3} parent=0 // pred_fallthru
    _
  // Predicated region
  $region26: #{unet_conv_block.3} parent=0 // pred_check
    _
  $region27: #{unet_conv_block.3} parent=0 // pred_check_branch
    %291 = sbr.rel (0) target = $region29
  $region28: #{unet_conv_block.3} parent=0 // pred_region
    _
  $region29: #{unet_conv_block.3} parent=0 // pred_fallthru
    _
  // Predicated region
  $region30: #{unet_conv_block.3} parent=0 // pred_check
    _
  $region31: #{unet_conv_block.3} parent=0 // pred_check_branch
    %293 = sbr.rel (0) target = $region33
  $region32: #{unet_conv_block.3} parent=0 // pred_region
    _
  $region33: #{unet_conv_block.3} parent=0 // pred_fallthru
    _
  // Predicated region
  $region34: #{unet_conv_block.3} parent=0 // pred_check
    _
  $region35: #{unet_conv_block.3} parent=0 // pred_check_branch
    %295 = sbr.rel (0) target = $region37
  $region36: #{unet_conv_block.3} parent=0 // pred_region
    _
  $region37: #{unet_conv_block.3} parent=0 // pred_fallthru
    _

</llo_original>
